<compile_context>
chip_gen: v7x
topology: tpu7x:2x2x1
jax: 0.10.0
libtpu: 0.0.40
codegen_flags: <defaults>
</compile_context>

<pallas_src>
import functools

import jax
import jax.numpy as jnp
import numpy as np
from jax import lax
from jax.experimental import pallas as pl
from jax.experimental.pallas import tpu as pltpu


# Tap offsets (oy, ox) for a 3x3 kernel with padding=1, ordered (ky, kx).
_TAPS = tuple((ky - 1, kx - 1) for ky in range(3) for kx in range(3))


def _round_up(x, m):
    return (x + m - 1) // m * m


def _pick_images_per_step(batch, n_per_image, max_nb=8):
    """Pick how many images to pack per grid step.

    Keeps the grid length >= 2 (so both v7x TensorCores get work) while
    amortizing per-step overhead; lane-concatenation of images requires the
    per-image flattened size to be a multiple of 128.
    """
    nb = 1
    if n_per_image % 128 == 0:
        for cand in range(2, max_nb + 1):
            if batch % cand == 0 and batch // cand >= 2:
                nb = cand
    return nb


def _make_tap_masks(nb, h, w):
    """(9, 1, nb*h*w) float32 validity masks for the 9 conv taps."""
    n_tot = nb * h * w
    q = np.arange(n_tot, dtype=np.int64) % (h * w)
    hh = q // w
    ww = q % w
    rows = []
    for oy, ox in _TAPS:
        valid = (hh + oy >= 0) & (hh + oy < h) & (ww + ox >= 0) & (ww + ox < w)
        rows.append(valid.astype(np.float32))
    return np.stack(rows).reshape(9, 1, n_tot)


def _prep_weight(w, cin_p, cout_p):
    """(Cout, Cin, 3, 3) OIHW -> (cout_p, 9*cin_p) bf16 matmul weight.

    Column order is (ky, kx, ci) to match the tap-major / channel-minor row
    order of the in-kernel im2col patches; padded rows/columns are zero.
    """
    cout, cin = w.shape[0], w.shape[1]
    wt = jnp.transpose(w, (0, 2, 3, 1))                       # (Cout, 3, 3, Cin)
    wt = jnp.pad(wt, ((0, cout_p - cout), (0, 0), (0, 0), (0, cin_p - cin)))
    return wt.reshape(cout_p, 9 * cin_p).astype(jnp.bfloat16)


def _block_kernel(x_ref, mask_ref, w1_ref, b1_ref, w2_ref, b2_ref, o_ref, *, W):
    # x_ref:    (NB, Cin_p, H*W)     f32  input images, channels padded to 8k
    # mask_ref: (9, 1, NB*H*W)       f32  0/1 validity mask per conv tap
    # w1_ref:   (Cout_p, 9*Cin_p)    bf16 conv1 im2col weight
    # b1_ref:   (Cout_p, 1)          f32  conv1 bias
    # w2_ref:   (Cout_p, 9*Cout_p)   bf16 conv2 im2col weight
    # b2_ref:   (Cout_p, 1)          f32  conv2 bias
    # o_ref:    (NB, Cout, H*W)      f32  output (lane-dense: H*W on lanes)
    NB = x_ref.shape[0]
    Cout = o_ref.shape[1]
    N = o_ref.shape[2]          # H*W per image
    n_tot = NB * N

    # Merge the NB images along the lane axis (aligned concat: N % 128 == 0
    # whenever NB > 1 by construction in the wrapper).
    if NB == 1:
        xm = x_ref[0]
    else:
        xm = jnp.concatenate([x_ref[i] for i in range(NB)], axis=-1)

    # Load each tap mask once; reused by both convolutions.
    tap_masks = [mask_ref[t] for t in range(9)]   # each (1, n_tot) f32

    def conv3x3_relu(src, w_ref, b_ref):
        # src: (C_p, n_tot) f32, padded channel rows are exactly zero.
        blocks = []
        for t, (oy, ox) in enumerate(_TAPS):
            d = oy * W + ox                      # flattened source offset
            if d == 0:
                blocks.append(src)               # center tap: always valid
            else:
                # out[p] = src[p + d] (circular), boundary bleed zeroed by mask.
                shifted = pltpu.roll(src, (-d) % n_tot, axis=1)
                blocks.append(shifted * tap_masks[t])
        # im2col patches: (9*C_p, n_tot); sublane concat at 8-aligned offsets.
        patches = jnp.concatenate(blocks, axis=0).astype(jnp.bfloat16)
        acc = jnp.dot(w_ref[...], patches, preferred_element_type=jnp.float32)
        return jnp.maximum(acc + b_ref[...], 0.0)   # (Cout_p, n_tot) f32

    h1 = conv3x3_relu(xm, w1_ref, b1_ref)   # relu(conv1); padded rows stay 0
    y = conv3x3_relu(h1, w2_ref, b2_ref)    # relu(conv2)

    # Un-merge images; lane slices are at N-aligned (>=128) offsets.
    for i in range(NB):
        o_ref[i] = y[:Cout, i * N:(i + 1) * N].astype(o_ref.dtype)


def block_forward(x, w1, b1, w2, b2, *, images_per_step=None):
    """Forward pass of `Block`.

    x  : (B, Cin, H, W)    float32  (PyTorch NCHW layout)
    w1 : (Cout, Cin, 3, 3) float32  (PyTorch OIHW layout)
    b1 : (Cout,)
    w2 : (Cout, Cout, 3, 3)
    b2 : (Cout,)
    returns: (B, Cout, H, W) float32
    """
    B, Cin, H, W = x.shape
    Cout = w1.shape[0]
    N = H * W
    cin_p = _round_up(Cin, 8)
    cout_p = _round_up(Cout, 8)

    NB = images_per_step or _pick_images_per_step(B, N)
    assert B % NB == 0, "images_per_step must divide the batch"
    n_tot = NB * N

    # NCHW -> (B, C, H*W): a free reshape; lane (minor) dim is H*W.
    x_flat = x.reshape(B, Cin, N)
    if cin_p != Cin:
        # Pad channels to a sublane-aligned count (zero weight columns match).
        x_flat = jnp.pad(x_flat, ((0, 0), (0, cin_p - Cin), (0, 0)))

    w1m = _prep_weight(w1, cin_p, cout_p)     # (cout_p, 9*cin_p)  bf16
    w2m = _prep_weight(w2, cout_p, cout_p)    # (cout_p, 9*cout_p) bf16
    b1c = jnp.pad(b1, (0, cout_p - Cout)).reshape(cout_p, 1).astype(jnp.float32)
    b2c = jnp.pad(b2, (0, cout_p - Cout)).reshape(cout_p, 1).astype(jnp.float32)

    masks = jnp.asarray(_make_tap_masks(NB, H, W))   # (9, 1, n_tot) f32

    kernel = functools.partial(_block_kernel, W=W)

    out_flat = pl.pallas_call(
        kernel,
        out_shape=jax.ShapeDtypeStruct((B, Cout, N), jnp.float32),
        grid_spec=pltpu.PrefetchScalarGridSpec(
            num_scalar_prefetch=0,
            grid=(B // NB,),
            in_specs=[
                pl.BlockSpec((NB, cin_p, N), lambda b: (b, 0, 0)),
                pl.BlockSpec((9, 1, n_tot), lambda b: (0, 0, 0)),
                pl.BlockSpec((cout_p, 9 * cin_p), lambda b: (0, 0)),
                pl.BlockSpec((cout_p, 1), lambda b: (0, 0)),
                pl.BlockSpec((cout_p, 9 * cout_p), lambda b: (0, 0)),
                pl.BlockSpec((cout_p, 1), lambda b: (0, 0)),
            ],
            out_specs=pl.BlockSpec((NB, Cout, N), lambda b: (b, 0, 0)),
        ),
        compiler_params=pltpu.CompilerParams(
            dimension_semantics=("parallel",),
        ),
    )(x_flat, masks, w1m, b1c, w2m, b2c)

    # (B, Cout, H*W) -> (B, Cout, H, W): free reshape, already NCHW.
    return out_flat.reshape(B, Cout, H, W)


def _reference_forward(x, w1, b1, w2, b2):
    """Pure-JAX reference using lax.conv (for correctness checking)."""
    dn = ("NCHW", "OIHW", "NCHW")

    def conv(z, w, b):
        y = lax.conv_general_dilated(
            z, w, window_strides=(1, 1), padding=((1, 1), (1, 1)),
            dimension_numbers=dn,
        )
        return y + b.reshape(1, -1, 1, 1)

    h = jnp.maximum(conv(x, w1, b1), 0.0)
    return jnp.maximum(conv(h, w2, b2), 0.0)


if __name__ == "__main__":
    # Small synthetic configuration consistent with the module.
    B, Cin, Cout, H, W = 2, 4, 8, 16, 16

    key = jax.random.PRNGKey(0)
    kx, kw1, kb1, kw2, kb2 = jax.random.split(key, 5)

    x = jax.random.normal(kx, (B, Cin, H, W), dtype=jnp.float32)

    # Deterministic parameter init (PyTorch OIHW conv weight layout).
    w1 = jax.random.normal(kw1, (Cout, Cin, 3, 3), dtype=jnp.float32) / jnp.sqrt(9.0 * Cin)
    b1 = jax.random.normal(kb1, (Cout,), dtype=jnp.float32) * 0.01
    w2 = jax.random.normal(kw2, (Cout, Cout, 3, 3), dtype=jnp.float32) / jnp.sqrt(9.0 * Cout)
    b2 = jax.random.normal(kb2, (Cout,), dtype=jnp.float32) * 0.01

    fwd = jax.jit(block_forward)
    y = jax.block_until_ready(fwd(x, w1, b1, w2, b2))
    y_ref = jax.block_until_ready(_reference_forward(x, w1, b1, w2, b2))

    assert y.shape == (B, Cout, H, W)
    max_err = float(jnp.max(jnp.abs(y - y_ref)))
    # bf16 matmul inputs with f32 accumulation: loosened tolerance vs pure f32.
    assert jnp.allclose(y, y_ref, atol=5e-2, rtol=5e-2), (
        f"mismatch vs reference conv (max abs err = {max_err})")

    print("KERNEL_OK")
</pallas_src>

<mosaic_0001>
module attributes {stable_mosaic.version = 11 : i64} {
  func.func @_block_kernel(%arg0: i32, %arg1: memref<1x8x256xf32, #tpu.memory_space<vmem>>, %arg2: memref<9x1x256xf32, #tpu.memory_space<vmem>>, %arg3: memref<8x72xbf16, #tpu.memory_space<vmem>>, %arg4: memref<8x1xf32, #tpu.memory_space<vmem>>, %arg5: memref<8x72xbf16, #tpu.memory_space<vmem>>, %arg6: memref<8x1xf32, #tpu.memory_space<vmem>>, %arg7: memref<1x8x256xf32, #tpu.memory_space<vmem>>) attributes {dimension_semantics = [#tpu.dimension_semantics<parallel>], iteration_bounds = array<i64: 2>, scalar_prefetch = 0 : i64, scratch_operands = 0 : i64, tpu.core_type = #tpu.core_type<tc>, window_params = [{transform_indices = @transform_0, window_bounds = array<i64: 1, 8, 256>}, {pipeline_mode = #tpu.pipeline_mode<synchronous>, transform_indices = @transform_1, window_bounds = array<i64: 9, 1, 256>}, {pipeline_mode = #tpu.pipeline_mode<synchronous>, transform_indices = @transform_2, window_bounds = array<i64: 8, 72>}, {pipeline_mode = #tpu.pipeline_mode<synchronous>, transform_indices = @transform_3, window_bounds = array<i64: 8, 1>}, {pipeline_mode = #tpu.pipeline_mode<synchronous>, transform_indices = @transform_4, window_bounds = array<i64: 8, 72>}, {pipeline_mode = #tpu.pipeline_mode<synchronous>, transform_indices = @transform_5, window_bounds = array<i64: 8, 1>}, {transform_indices = @transform_6, window_bounds = array<i64: 1, 8, 256>}]} {
    %c0 = arith.constant 0 : index
    %c0_0 = arith.constant 0 : index
    %c0_1 = arith.constant 0 : index
    %0 = vector.load %arg1[%c0, %c0_0, %c0_1] : memref<1x8x256xf32, #tpu.memory_space<vmem>>, vector<1x8x256xf32>
    %1 = vector.shape_cast %0 : vector<1x8x256xf32> to vector<8x256xf32>
    %c0_2 = arith.constant 0 : index
    %c0_3 = arith.constant 0 : index
    %c0_4 = arith.constant 0 : index
    %2 = vector.load %arg2[%c0_2, %c0_3, %c0_4] : memref<9x1x256xf32, #tpu.memory_space<vmem>>, vector<1x1x256xf32>
    %3 = vector.shape_cast %2 : vector<1x1x256xf32> to vector<1x256xf32>
    %c1 = arith.constant 1 : index
    %c0_5 = arith.constant 0 : index
    %c0_6 = arith.constant 0 : index
    %4 = vector.load %arg2[%c1, %c0_5, %c0_6] : memref<9x1x256xf32, #tpu.memory_space<vmem>>, vector<1x1x256xf32>
    %5 = vector.shape_cast %4 : vector<1x1x256xf32> to vector<1x256xf32>
    %c2 = arith.constant 2 : index
    %c0_7 = arith.constant 0 : index
    %c0_8 = arith.constant 0 : index
    %6 = vector.load %arg2[%c2, %c0_7, %c0_8] : memref<9x1x256xf32, #tpu.memory_space<vmem>>, vector<1x1x256xf32>
    %7 = vector.shape_cast %6 : vector<1x1x256xf32> to vector<1x256xf32>
    %c3 = arith.constant 3 : index
    %c0_9 = arith.constant 0 : index
    %c0_10 = arith.constant 0 : index
    %8 = vector.load %arg2[%c3, %c0_9, %c0_10] : memref<9x1x256xf32, #tpu.memory_space<vmem>>, vector<1x1x256xf32>
    %9 = vector.shape_cast %8 : vector<1x1x256xf32> to vector<1x256xf32>
    %c5 = arith.constant 5 : index
    %c0_11 = arith.constant 0 : index
    %c0_12 = arith.constant 0 : index
    %10 = vector.load %arg2[%c5, %c0_11, %c0_12] : memref<9x1x256xf32, #tpu.memory_space<vmem>>, vector<1x1x256xf32>
    %11 = vector.shape_cast %10 : vector<1x1x256xf32> to vector<1x256xf32>
    %c6 = arith.constant 6 : index
    %c0_13 = arith.constant 0 : index
    %c0_14 = arith.constant 0 : index
    %12 = vector.load %arg2[%c6, %c0_13, %c0_14] : memref<9x1x256xf32, #tpu.memory_space<vmem>>, vector<1x1x256xf32>
    %13 = vector.shape_cast %12 : vector<1x1x256xf32> to vector<1x256xf32>
    %c7 = arith.constant 7 : index
    %c0_15 = arith.constant 0 : index
    %c0_16 = arith.constant 0 : index
    %14 = vector.load %arg2[%c7, %c0_15, %c0_16] : memref<9x1x256xf32, #tpu.memory_space<vmem>>, vector<1x1x256xf32>
    %15 = vector.shape_cast %14 : vector<1x1x256xf32> to vector<1x256xf32>
    %c8 = arith.constant 8 : index
    %c0_17 = arith.constant 0 : index
    %c0_18 = arith.constant 0 : index
    %16 = vector.load %arg2[%c8, %c0_17, %c0_18] : memref<9x1x256xf32, #tpu.memory_space<vmem>>, vector<1x1x256xf32>
    %17 = vector.shape_cast %16 : vector<1x1x256xf32> to vector<1x256xf32>
    %c17_i32 = arith.constant 17 : i32
    %18 = tpu.dynamic_rotate %1 by %c17_i32 dim 1 : vector<8x256xf32>, i32 -> vector<8x256xf32>
    %19 = vector.broadcast %3 : vector<1x256xf32> to vector<8x256xf32>
    %20 = arith.mulf %18, %19 : vector<8x256xf32>
    %c16_i32 = arith.constant 16 : i32
    %21 = tpu.dynamic_rotate %1 by %c16_i32 dim 1 : vector<8x256xf32>, i32 -> vector<8x256xf32>
    %22 = vector.broadcast %5 : vector<1x256xf32> to vector<8x256xf32>
    %23 = arith.mulf %21, %22 : vector<8x256xf32>
    %c15_i32 = arith.constant 15 : i32
    %24 = tpu.dynamic_rotate %1 by %c15_i32 dim 1 : vector<8x256xf32>, i32 -> vector<8x256xf32>
    %25 = vector.broadcast %7 : vector<1x256xf32> to vector<8x256xf32>
    %26 = arith.mulf %24, %25 : vector<8x256xf32>
    %c1_i32 = arith.constant 1 : i32
    %27 = tpu.dynamic_rotate %1 by %c1_i32 dim 1 : vector<8x256xf32>, i32 -> vector<8x256xf32>
    %28 = vector.broadcast %9 : vector<1x256xf32> to vector<8x256xf32>
    %29 = arith.mulf %27, %28 : vector<8x256xf32>
    %c255_i32 = arith.constant 255 : i32
    %30 = tpu.dynamic_rotate %1 by %c255_i32 dim 1 : vector<8x256xf32>, i32 -> vector<8x256xf32>
    %31 = vector.broadcast %11 : vector<1x256xf32> to vector<8x256xf32>
    %32 = arith.mulf %30, %31 : vector<8x256xf32>
    %c241_i32 = arith.constant 241 : i32
    %33 = tpu.dynamic_rotate %1 by %c241_i32 dim 1 : vector<8x256xf32>, i32 -> vector<8x256xf32>
    %34 = vector.broadcast %13 : vector<1x256xf32> to vector<8x256xf32>
    %35 = arith.mulf %33, %34 : vector<8x256xf32>
    %c240_i32 = arith.constant 240 : i32
    %36 = tpu.dynamic_rotate %1 by %c240_i32 dim 1 : vector<8x256xf32>, i32 -> vector<8x256xf32>
    %37 = vector.broadcast %15 : vector<1x256xf32> to vector<8x256xf32>
    %38 = arith.mulf %36, %37 : vector<8x256xf32>
    %c239_i32 = arith.constant 239 : i32
    %39 = tpu.dynamic_rotate %1 by %c239_i32 dim 1 : vector<8x256xf32>, i32 -> vector<8x256xf32>
    %40 = vector.broadcast %17 : vector<1x256xf32> to vector<8x256xf32>
    %41 = arith.mulf %39, %40 : vector<8x256xf32>
    %42 = tpu.concatenate %20, %23, %26, %29, %1, %32, %35, %38, %41 in 0 : vector<8x256xf32>, vector<8x256xf32>, vector<8x256xf32>, vector<8x256xf32>, vector<8x256xf32>, vector<8x256xf32>, vector<8x256xf32>, vector<8x256xf32>, vector<8x256xf32> -> vector<72x256xf32>
    %43 = arith.truncf %42 : vector<72x256xf32> to vector<72x256xbf16>
    %c0_19 = arith.constant 0 : index
    %c0_20 = arith.constant 0 : index
    %44 = vector.load %arg3[%c0_19, %c0_20] : memref<8x72xbf16, #tpu.memory_space<vmem>>, vector<8x72xbf16>
    %cst = arith.constant dense<0.000000e+00> : vector<8x256xf32>
    %45 = tpu.matmul %44, %43, %cst {dimension_numbers = #tpu.dot_dimension_numbers<[1], [0], [0], [1], [0, 0, 1, 1], [], []>} : vector<8x72xbf16>, vector<72x256xbf16>, vector<8x256xf32> -> vector<8x256xf32>
    %c0_21 = arith.constant 0 : index
    %c0_22 = arith.constant 0 : index
    %46 = vector.load %arg4[%c0_21, %c0_22] : memref<8x1xf32, #tpu.memory_space<vmem>>, vector<8x1xf32>
    %47 = vector.broadcast %46 : vector<8x1xf32> to vector<8x256xf32>
    %48 = arith.addf %45, %47 : vector<8x256xf32>
    %cst_23 = arith.constant 0.000000e+00 : f32
    %49 = vector.broadcast %cst_23 : f32 to vector<8x256xf32>
    %50 = arith.maximumf %48, %49 : vector<8x256xf32>
    %c17_i32_24 = arith.constant 17 : i32
    %51 = tpu.dynamic_rotate %50 by %c17_i32_24 dim 1 : vector<8x256xf32>, i32 -> vector<8x256xf32>
    %52 = vector.broadcast %3 : vector<1x256xf32> to vector<8x256xf32>
    %53 = arith.mulf %51, %52 : vector<8x256xf32>
    %c16_i32_25 = arith.constant 16 : i32
    %54 = tpu.dynamic_rotate %50 by %c16_i32_25 dim 1 : vector<8x256xf32>, i32 -> vector<8x256xf32>
    %55 = vector.broadcast %5 : vector<1x256xf32> to vector<8x256xf32>
    %56 = arith.mulf %54, %55 : vector<8x256xf32>
    %c15_i32_26 = arith.constant 15 : i32
    %57 = tpu.dynamic_rotate %50 by %c15_i32_26 dim 1 : vector<8x256xf32>, i32 -> vector<8x256xf32>
    %58 = vector.broadcast %7 : vector<1x256xf32> to vector<8x256xf32>
    %59 = arith.mulf %57, %58 : vector<8x256xf32>
    %c1_i32_27 = arith.constant 1 : i32
    %60 = tpu.dynamic_rotate %50 by %c1_i32_27 dim 1 : vector<8x256xf32>, i32 -> vector<8x256xf32>
    %61 = vector.broadcast %9 : vector<1x256xf32> to vector<8x256xf32>
    %62 = arith.mulf %60, %61 : vector<8x256xf32>
    %c255_i32_28 = arith.constant 255 : i32
    %63 = tpu.dynamic_rotate %50 by %c255_i32_28 dim 1 : vector<8x256xf32>, i32 -> vector<8x256xf32>
    %64 = vector.broadcast %11 : vector<1x256xf32> to vector<8x256xf32>
    %65 = arith.mulf %63, %64 : vector<8x256xf32>
    %c241_i32_29 = arith.constant 241 : i32
    %66 = tpu.dynamic_rotate %50 by %c241_i32_29 dim 1 : vector<8x256xf32>, i32 -> vector<8x256xf32>
    %67 = vector.broadcast %13 : vector<1x256xf32> to vector<8x256xf32>
    %68 = arith.mulf %66, %67 : vector<8x256xf32>
    %c240_i32_30 = arith.constant 240 : i32
    %69 = tpu.dynamic_rotate %50 by %c240_i32_30 dim 1 : vector<8x256xf32>, i32 -> vector<8x256xf32>
    %70 = vector.broadcast %15 : vector<1x256xf32> to vector<8x256xf32>
    %71 = arith.mulf %69, %70 : vector<8x256xf32>
    %c239_i32_31 = arith.constant 239 : i32
    %72 = tpu.dynamic_rotate %50 by %c239_i32_31 dim 1 : vector<8x256xf32>, i32 -> vector<8x256xf32>
    %73 = vector.broadcast %17 : vector<1x256xf32> to vector<8x256xf32>
    %74 = arith.mulf %72, %73 : vector<8x256xf32>
    %75 = tpu.concatenate %53, %56, %59, %62, %50, %65, %68, %71, %74 in 0 : vector<8x256xf32>, vector<8x256xf32>, vector<8x256xf32>, vector<8x256xf32>, vector<8x256xf32>, vector<8x256xf32>, vector<8x256xf32>, vector<8x256xf32>, vector<8x256xf32> -> vector<72x256xf32>
    %76 = arith.truncf %75 : vector<72x256xf32> to vector<72x256xbf16>
    %c0_32 = arith.constant 0 : index
    %c0_33 = arith.constant 0 : index
    %77 = vector.load %arg5[%c0_32, %c0_33] : memref<8x72xbf16, #tpu.memory_space<vmem>>, vector<8x72xbf16>
    %cst_34 = arith.constant dense<0.000000e+00> : vector<8x256xf32>
    %78 = tpu.matmul %77, %76, %cst_34 {dimension_numbers = #tpu.dot_dimension_numbers<[1], [0], [0], [1], [0, 0, 1, 1], [], []>} : vector<8x72xbf16>, vector<72x256xbf16>, vector<8x256xf32> -> vector<8x256xf32>
    %c0_35 = arith.constant 0 : index
    %c0_36 = arith.constant 0 : index
    %79 = vector.load %arg6[%c0_35, %c0_36] : memref<8x1xf32, #tpu.memory_space<vmem>>, vector<8x1xf32>
    %80 = vector.broadcast %79 : vector<8x1xf32> to vector<8x256xf32>
    %81 = arith.addf %78, %80 : vector<8x256xf32>
    %cst_37 = arith.constant 0.000000e+00 : f32
    %82 = vector.broadcast %cst_37 : f32 to vector<8x256xf32>
    %83 = arith.maximumf %81, %82 : vector<8x256xf32>
    %c0_38 = arith.constant 0 : index
    %c0_39 = arith.constant 0 : index
    %c0_40 = arith.constant 0 : index
    %84 = vector.load %arg7[%c0_38, %c0_39, %c0_40] : memref<1x8x256xf32, #tpu.memory_space<vmem>>, vector<1x8x256xf32>
    %85 = vector.shape_cast %84 : vector<1x8x256xf32> to vector<8x256xf32>
    %86 = vector.shape_cast %83 : vector<8x256xf32> to vector<1x8x256xf32>
    tpu.vector_store %arg7[%c0_38, %c0_39, %c0_40], %86 {strides = array<i32>} : memref<1x8x256xf32, #tpu.memory_space<vmem>>, vector<1x8x256xf32>,
    return
  }
  func.func @transform_0(%arg0: i32) -> (i32, i32, i32) {
    %c0_i32 = arith.constant 0 : i32
    %c0_i32_0 = arith.constant 0 : i32
    %c0_i32_1 = arith.constant 0 : i32
    return %arg0, %c0_i32, %c0_i32_0 : i32, i32, i32
  }
  func.func @transform_1(%arg0: i32) -> (i32, i32, i32) {
    %c0_i32 = arith.constant 0 : i32
    %c0_i32_0 = arith.constant 0 : i32
    %c0_i32_1 = arith.constant 0 : i32
    %c0_i32_2 = arith.constant 0 : i32
    return %c0_i32, %c0_i32_0, %c0_i32_1 : i32, i32, i32
  }
  func.func @transform_2(%arg0: i32) -> (i32, i32) {
    %c0_i32 = arith.constant 0 : i32
    %c0_i32_0 = arith.constant 0 : i32
    %c0_i32_1 = arith.constant 0 : i32
    return %c0_i32, %c0_i32_0 : i32, i32
  }
  func.func @transform_3(%arg0: i32) -> (i32, i32) {
    %c0_i32 = arith.constant 0 : i32
    %c0_i32_0 = arith.constant 0 : i32
    %c0_i32_1 = arith.constant 0 : i32
    return %c0_i32, %c0_i32_0 : i32, i32
  }
  func.func @transform_4(%arg0: i32) -> (i32, i32) {
    %c0_i32 = arith.constant 0 : i32
    %c0_i32_0 = arith.constant 0 : i32
    %c0_i32_1 = arith.constant 0 : i32
    return %c0_i32, %c0_i32_0 : i32, i32
  }
  func.func @transform_5(%arg0: i32) -> (i32, i32) {
    %c0_i32 = arith.constant 0 : i32
    %c0_i32_0 = arith.constant 0 : i32
    %c0_i32_1 = arith.constant 0 : i32
    return %c0_i32, %c0_i32_0 : i32, i32
  }
  func.func @transform_6(%arg0: i32) -> (i32, i32, i32) {
    %c0_i32 = arith.constant 0 : i32
    %c0_i32_0 = arith.constant 0 : i32
    %c0_i32_1 = arith.constant 0 : i32
    return %arg0, %c0_i32, %c0_i32_0 : i32, i32, i32
  }
}

</mosaic_0001>

<llo_original>
// kernel: block_forward.1
$region0: #{block_forward.1}
  #allocation0 [shape = 'u32[]', space=smem, size = 0x4, offset = 0x4, fixed_abs, tag = 'smem constant byte address 0x4 - core index']
  #allocation1 [shape = 'u32[144,128]{1,0:T(1,128)}', space=vmem, size = 0x12000, scoped, tag = 'internal scratch']
  %s0 = inlined_call_operand.vmem [shape: f32[2,8,256], index: 0, kind: input, shape index: {}]
  %s1 = inlined_call_operand.vmem [shape: f32[9,1,256], index: 1, kind: input, shape index: {}]
  %s2 = inlined_call_operand.vmem [shape: bf16[8,72], index: 2, kind: input, shape index: {}]
  %s3 = inlined_call_operand.vmem [shape: f32[8,1], index: 3, kind: input, shape index: {}]
  %s4 = inlined_call_operand.vmem [shape: bf16[8,72], index: 4, kind: input, shape index: {}]
  %s5 = inlined_call_operand.vmem [shape: f32[8,1], index: 5, kind: input, shape index: {}]
  %s6 = inlined_call_operand.vmem [shape: f32[2,8,256], index: 6, kind: output, shape index: {}]
  %s7 = sld [smem:[#allocation0]]
  $region57: #{block_forward.1} parent=0
    _
  %s9 = ssub.s32 1, %s7
  %s10 = scalar_select 0, %s9, %s7
  loop: start=0, step=1, limit=4
  $region2: #{block_forward.1} parent=0 // loop_pre_header
    _
  $region3: #{block_forward.1} parent=0 // loop_header
    %s12 = sphi 0, %s16
    %p13 = scmp.ge.s32.totalorder %s12, 4
    %s22 = sphi 0, %s24
    %s25 = sphi 0, %s22
    %s26 = sphi 0, %s25
    %s42 = sphi 0, %s26
    %s46 = sphi 0, %s46
    %s48 = sphi 0, %s46
    %s49 = sphi 0, %s48
    %s63 = sphi 0, %s49
    %s67 = sphi 0, %s67
    %s69 = sphi 0, %s67
    %s70 = sphi 0, %s69
    %s84 = sphi 0, %s70
    %s88 = sphi 0, %s88
    %s90 = sphi 0, %s88
    %s91 = sphi 0, %s90
    %s105 = sphi 0, %s91
    %s109 = sphi 0, %s109
    %s111 = sphi 0, %s109
    %s112 = sphi 0, %s111
    %s126 = sphi 0, %s112
    %s130 = sphi 0, %s130
    %s132 = sphi 0, %s130
    %s133 = sphi 0, %s132
    %s147 = sphi 0, %s133
    %s153 = sphi 0, %s155
    %s156 = sphi 0, %s153
    %s157 = sphi 0, %s156
    %s173 = sphi 0, %s157
  $region4: #{block_forward.1} parent=0 // loop_header_branch
    %15 = sbr.rel (%p13) target = $region8
  $region5: #{block_forward.1} parent=0 // loop_body
    %s17 = ssub.s32 %s12, 1
    %s18 = ssub.s32 %s12, 2
    %s19 = sadd.s32 %s12, 1
    %s20 = ssub.s32 %s12, %s19
    %p21 = scmp.eq.s32.totalorder %s20, 0
    %s23 = sadd.s32 %s22, 1
    %s24 = scalar_select %p21, %s22, %s23
    %p27 = pneg %p21
    %p28 = scmp.eq.s32.totalorder %s12, 1
    %p29 = por %p27, %p28
    %p30 = scmp.ne.s32.totalorder %s22, %s25
    %p31 = scmp.eq.s32.totalorder %s12, 0
    %p32 = por %p30, %p31
    %p33 = scmp.ne.s32.totalorder %s22, %s25
    %p34 = scmp.eq.s32.totalorder %s17, 1
    %p35 = por %p33, %p34
    %p36 = scmp.ne.s32.totalorder %s25, %s26
    %p37 = scmp.eq.s32.totalorder %s17, 0
    %p38 = por %p36, %p37
    %p39 = scmp.ne.s32.totalorder %s25, %s26
    %p40 = scmp.eq.s32.totalorder %s18, 1
    %p41 = por %p39, %p40
    %p43 = scmp.ne.s32.totalorder %s26, %s42
    %p44 = scmp.eq.s32.totalorder %s18, 0
    %p45 = por %p43, %p44
    %s47 = sadd.s32 %s46, 1
    %p50 = scmp.eq.s32.totalorder %s12, 1
    %p51 = scmp.ne.s32.totalorder %s46, %s48
    %p52 = scmp.eq.s32.totalorder %s12, 0
    %p53 = por %p51, %p52
    %p54 = scmp.ne.s32.totalorder %s46, %s48
    %p55 = scmp.eq.s32.totalorder %s17, 1
    %p56 = por %p54, %p55
    %p57 = scmp.ne.s32.totalorder %s48, %s49
    %p58 = scmp.eq.s32.totalorder %s17, 0
    %p59 = por %p57, %p58
    %p60 = scmp.ne.s32.totalorder %s48, %s49
    %p61 = scmp.eq.s32.totalorder %s18, 1
    %p62 = por %p60, %p61
    %p64 = scmp.ne.s32.totalorder %s49, %s63
    %p65 = scmp.eq.s32.totalorder %s18, 0
    %p66 = por %p64, %p65
    %s68 = sadd.s32 %s67, 1
    %p71 = scmp.eq.s32.totalorder %s12, 1
    %p72 = scmp.ne.s32.totalorder %s67, %s69
    %p73 = scmp.eq.s32.totalorder %s12, 0
    %p74 = por %p72, %p73
    %p75 = scmp.ne.s32.totalorder %s67, %s69
    %p76 = scmp.eq.s32.totalorder %s17, 1
    %p77 = por %p75, %p76
    %p78 = scmp.ne.s32.totalorder %s69, %s70
    %p79 = scmp.eq.s32.totalorder %s17, 0
    %p80 = por %p78, %p79
    %p81 = scmp.ne.s32.totalorder %s69, %s70
    %p82 = scmp.eq.s32.totalorder %s18, 1
    %p83 = por %p81, %p82
    %p85 = scmp.ne.s32.totalorder %s70, %s84
    %p86 = scmp.eq.s32.totalorder %s18, 0
    %p87 = por %p85, %p86
    %s89 = sadd.s32 %s88, 1
    %p92 = scmp.eq.s32.totalorder %s12, 1
    %p93 = scmp.ne.s32.totalorder %s88, %s90
    %p94 = scmp.eq.s32.totalorder %s12, 0
    %p95 = por %p93, %p94
    %p96 = scmp.ne.s32.totalorder %s88, %s90
    %p97 = scmp.eq.s32.totalorder %s17, 1
    %p98 = por %p96, %p97
    %p99 = scmp.ne.s32.totalorder %s90, %s91
    %p100 = scmp.eq.s32.totalorder %s17, 0
    %p101 = por %p99, %p100
    %p102 = scmp.ne.s32.totalorder %s90, %s91
    %p103 = scmp.eq.s32.totalorder %s18, 1
    %p104 = por %p102, %p103
    %p106 = scmp.ne.s32.totalorder %s91, %s105
    %p107 = scmp.eq.s32.totalorder %s18, 0
    %p108 = por %p106, %p107
    %s110 = sadd.s32 %s109, 1
    %p113 = scmp.eq.s32.totalorder %s12, 1
    %p114 = scmp.ne.s32.totalorder %s109, %s111
    %p115 = scmp.eq.s32.totalorder %s12, 0
    %p116 = por %p114, %p115
    %p117 = scmp.ne.s32.totalorder %s109, %s111
    %p118 = scmp.eq.s32.totalorder %s17, 1
    %p119 = por %p117, %p118
    %p120 = scmp.ne.s32.totalorder %s111, %s112
    %p121 = scmp.eq.s32.totalorder %s17, 0
    %p122 = por %p120, %p121
    %p123 = scmp.ne.s32.totalorder %s111, %s112
    %p124 = scmp.eq.s32.totalorder %s18, 1
    %p125 = por %p123, %p124
    %p127 = scmp.ne.s32.totalorder %s112, %s126
    %p128 = scmp.eq.s32.totalorder %s18, 0
    %p129 = por %p127, %p128
    %s131 = sadd.s32 %s130, 1
    %p134 = scmp.eq.s32.totalorder %s12, 1
    %p135 = scmp.ne.s32.totalorder %s130, %s132
    %p136 = scmp.eq.s32.totalorder %s12, 0
    %p137 = por %p135, %p136
    %p138 = scmp.ne.s32.totalorder %s130, %s132
    %p139 = scmp.eq.s32.totalorder %s17, 1
    %p140 = por %p138, %p139
    %p141 = scmp.ne.s32.totalorder %s132, %s133
    %p142 = scmp.eq.s32.totalorder %s17, 0
    %p143 = por %p141, %p142
    %p144 = scmp.ne.s32.totalorder %s132, %s133
    %p145 = scmp.eq.s32.totalorder %s18, 1
    %p146 = por %p144, %p145
    %p148 = scmp.ne.s32.totalorder %s133, %s147
    %p149 = scmp.eq.s32.totalorder %s18, 0
    %p150 = por %p148, %p149
    %s151 = ssub.s32 %s12, %s19
    %p152 = scmp.eq.s32.totalorder %s151, 0
    %s154 = sadd.s32 %s153, 1
    %s155 = scalar_select %p152, %s153, %s154
    %p158 = pneg %p152
    %p159 = scmp.eq.s32.totalorder %s12, 1
    %p160 = por %p158, %p159
    %p161 = scmp.ne.s32.totalorder %s153, %s156
    %p162 = scmp.eq.s32.totalorder %s12, 0
    %p163 = por %p161, %p162
    %p164 = scmp.ne.s32.totalorder %s153, %s156
    %p165 = scmp.eq.s32.totalorder %s17, 1
    %p166 = por %p164, %p165
    %p167 = scmp.ne.s32.totalorder %s156, %s157
    %p168 = scmp.eq.s32.totalorder %s17, 0
    %p169 = por %p167, %p168
    %p170 = scmp.ne.s32.totalorder %s156, %s157
    %p171 = scmp.eq.s32.totalorder %s18, 1
    %p172 = por %p170, %p171
    %p174 = scmp.ne.s32.totalorder %s157, %s173
    %p175 = scmp.eq.s32.totalorder %s18, 0
    %p176 = por %p174, %p175
    %p177 = scmp.le.s32.totalorder 1, %s12
    %p178 = scmp.lt.s32.totalorder %s12, 3
    %p179 = pnand %p177, %p178
    %p180 = pneg %p179
    // Predicated region
    $region9: #{block_forward.1} parent=5 // pred_check
      _
    $region10: #{block_forward.1} parent=5 // pred_check_branch
      %182 = sbr.rel (%p179) target = $region12
    $region11: #{block_forward.1} parent=5 // pred_region
      %s183 = ssub.s32 %s12, 1
      // Predicated region
      $region13: #{block_forward.1} parent=11 // pred_check
        %p184 = pneg %p59
      $region14: #{block_forward.1} parent=11 // pred_check_branch
        %186 = sbr.rel (%p184) target = $region16
      $region15: #{block_forward.1} parent=11 // pred_region
        _
      $region16: #{block_forward.1} parent=11 // pred_fallthru
        _
      // Predicated region
      $region17: #{block_forward.1} parent=11 // pred_check
        %p187 = pneg %p80
      $region18: #{block_forward.1} parent=11 // pred_check_branch
        %189 = sbr.rel (%p187) target = $region20
      $region19: #{block_forward.1} parent=11 // pred_region
        _
      $region20: #{block_forward.1} parent=11 // pred_fallthru
        _
      // Predicated region
      $region21: #{block_forward.1} parent=11 // pred_check
        %p190 = pneg %p101
      $region22: #{block_forward.1} parent=11 // pred_check_branch
        %192 = sbr.rel (%p190) target = $region24
      $region23: #{block_forward.1} parent=11 // pred_region
        _
      $region24: #{block_forward.1} parent=11 // pred_fallthru
        _
      // Predicated region
      $region25: #{block_forward.1} parent=11 // pred_check
        %p193 = pneg %p122
      $region26: #{block_forward.1} parent=11 // pred_check_branch
        %195 = sbr.rel (%p193) target = $region28
      $region27: #{block_forward.1} parent=11 // pred_region
        _
      $region28: #{block_forward.1} parent=11 // pred_fallthru
        _
      // Predicated region
      $region29: #{block_forward.1} parent=11 // pred_check
        %p196 = pneg %p143
      $region30: #{block_forward.1} parent=11 // pred_check_branch
        %198 = sbr.rel (%p196) target = $region32
      $region31: #{block_forward.1} parent=11 // pred_region
        _
      $region32: #{block_forward.1} parent=11 // pred_fallthru
        _
    $region12: #{block_forward.1} parent=5 // pred_fallthru
      _
    %p199 = scmp.lt.s32.totalorder %s12, 2
    // Predicated region
    $region33: #{block_forward.1} parent=5 // pred_check
      %p200 = pneg %p199
    $region34: #{block_forward.1} parent=5 // pred_check_branch
      %202 = sbr.rel (%p200) target = $region36
    $region35: #{block_forward.1} parent=5 // pred_region
      // Predicated region
      $region37: #{block_forward.1} parent=35 // pred_check
        %p203 = pneg %p32
      $region38: #{block_forward.1} parent=35 // pred_check_branch
        %205 = sbr.rel (%p203) target = $region40
      $region39: #{block_forward.1} parent=35 // pred_region
        %p206 = scmp.lt.s32.totalorder %s12, 1
        %s207 = scalar_select %p206, %s12, 1
        %s208 = smul.addr %s207, 2
        %s209 = smul.addr %s208, 8
        %s210 = scalar_lea.vmem %s0, %s209
      $region40: #{block_forward.1} parent=35 // pred_fallthru
        _
    $region36: #{block_forward.1} parent=5 // pred_fallthru
      _
    %p211 = scmp.le.s32.totalorder 1, %s12
    %p212 = scmp.lt.s32.totalorder %s12, 3
    %p213 = pnand %p211, %p212
    %p214 = pneg %p213
    // Predicated region
    $region41: #{block_forward.1} parent=5 // pred_check
      _
    $region42: #{block_forward.1} parent=5 // pred_check_branch
      %216 = sbr.rel (%p213) target = $region44
    $region43: #{block_forward.1} parent=5 // pred_region
      %s217 = ssub.s32 %s12, 1
      %p218 = scmp.lt.s32.totalorder %s17, 1
      %s219 = scalar_select %p218, %s17, 1
      %s220 = smul.addr %s219, 2
      %s221 = smul.addr %s220, 8
      %s222 = scalar_lea.vmem %s0, %s221
      %p223 = pneg %p38
      %p224 = pneg %p35
      %p225 = pneg %p59
      %p226 = pneg %p56
      %p227 = pneg %p80
      %p228 = pneg %p77
      %p229 = pneg %p101
      %p230 = pneg %p98
      %p231 = pneg %p122
      %p232 = pneg %p119
      %p233 = pneg %p143
      %p234 = pneg %p140
      %p235 = pneg %p169
      %p236 = pneg %p166
      %p237 = scmp.lt.s32.totalorder %s17, 1
      %s238 = scalar_select %p237, %s17, 1
      %s239 = smul.addr %s238, 2
      %s240 = smul.addr %s239, 8
      %s241 = scalar_lea.vmem %s6, %s240
      %p242 = scmp.lt.s32.totalorder %s17, 1
      %s243 = scalar_select %p242, %s17, 1
      %s244 = smul.addr %s243, 2
      %s245 = smul.addr %s244, 8
      %s246 = scalar_lea.vmem %s0, %s245
      %p247 = scmp.lt.s32.totalorder %s17, 1
      %s248 = scalar_select %p247, %s17, 1
      %s249 = smul.addr %s248, 2
      %s250 = smul.addr %s249, 8
      %s251 = scalar_lea.vmem %s6, %s250
      %v253 = vld [vmem:[%s246] sm:$0xff]
      %v254 = vld [vmem:[%s246 + $0x8] sm:$0xff]
      %v255 = vld [vmem:[%s1] sm:$0x3]
      %s256 = scalar_lea.vmem %s1, 2
      %v257 = vld [vmem:[%s256] sm:$0x3]
      %s258 = scalar_lea.vmem %s1, 4
      %v259 = vld [vmem:[%s258] sm:$0x3]
      %s260 = scalar_lea.vmem %s1, 6
      %v261 = vld [vmem:[%s260] sm:$0x3]
      %s262 = scalar_lea.vmem %s1, 10
      %v263 = vld [vmem:[%s262] sm:$0x3]
      %s264 = scalar_lea.vmem %s1, 12
      %v265 = vld [vmem:[%s264] sm:$0x3]
      %s266 = scalar_lea.vmem %s1, 14
      %v267 = vld [vmem:[%s266] sm:$0x3]
      %s268 = scalar_lea.vmem %s1, 16
      %v269 = vld [vmem:[%s268] sm:$0x3]
      %270 = vrot.lane.b32.xlu0 %v253, 17
      %v271 = vpop.permute.xlu0 %270
      %272 = vrot.lane.b32.xlu0 %v254, 17
      %v273 = vpop.permute.xlu0 %272
      %v274 = vlaneseq
      %v275 = vand.u32 %v274, 127
      %vm276 = vcmp.lt.s32.totalorder %v275, 17
      %v277 = vsel %vm276, %v271, %v273
      %v278 = vsel %vm276, %v273, %v271
      %v280 = vlaneseq
      %v281 = vshrl.u32 %v280, 7
      %v282 = vsub.s32 0, %v281
      %v283 = vrot.slane %v255, %v282
      %v284 = vlaneseq
      %v285 = vshrl.u32 %v284, 7
      %v286 = vsub.s32 1, %v285
      %v287 = vrot.slane %v255, %v286
      %v290 = vmul.f32 %v278, %v283
      %v291 = vmul.f32 %v277, %v287
      %292 = vrot.lane.b32.xlu0 %v253, 16
      %v293 = vpop.permute.xlu0 %292
      %294 = vrot.lane.b32.xlu0 %v254, 16
      %v295 = vpop.permute.xlu0 %294
      %vm296 = vcmp.lt.s32.totalorder %v275, 16
      %v297 = vsel %vm296, %v293, %v295
      %v298 = vsel %vm296, %v295, %v293
      %v300 = vlaneseq
      %v301 = vshrl.u32 %v300, 7
      %v302 = vsub.s32 0, %v301
      %v303 = vrot.slane %v257, %v302
      %v304 = vlaneseq
      %v305 = vshrl.u32 %v304, 7
      %v306 = vsub.s32 1, %v305
      %v307 = vrot.slane %v257, %v306
      %v310 = vmul.f32 %v298, %v303
      %v311 = vmul.f32 %v297, %v307
      %312 = vrot.lane.b32.xlu0 %v253, 15
      %v313 = vpop.permute.xlu0 %312
      %314 = vrot.lane.b32.xlu0 %v254, 15
      %v315 = vpop.permute.xlu0 %314
      %vm316 = vcmp.lt.s32.totalorder %v275, 15
      %v317 = vsel %vm316, %v313, %v315
      %v318 = vsel %vm316, %v315, %v313
      %v320 = vlaneseq
      %v321 = vshrl.u32 %v320, 7
      %v322 = vsub.s32 0, %v321
      %v323 = vrot.slane %v259, %v322
      %v324 = vlaneseq
      %v325 = vshrl.u32 %v324, 7
      %v326 = vsub.s32 1, %v325
      %v327 = vrot.slane %v259, %v326
      %v330 = vmul.f32 %v318, %v323
      %v331 = vmul.f32 %v317, %v327
      %332 = vrot.lane.b32.xlu0 %v253, 1
      %v333 = vpop.permute.xlu0 %332
      %334 = vrot.lane.b32.xlu0 %v254, 1
      %v335 = vpop.permute.xlu0 %334
      %vm336 = vcmp.lt.s32.totalorder %v275, 1
      %v337 = vsel %vm336, %v333, %v335
      %v338 = vsel %vm336, %v335, %v333
      %v340 = vlaneseq
      %v341 = vshrl.u32 %v340, 7
      %v342 = vsub.s32 0, %v341
      %v343 = vrot.slane %v261, %v342
      %v344 = vlaneseq
      %v345 = vshrl.u32 %v344, 7
      %v346 = vsub.s32 1, %v345
      %v347 = vrot.slane %v261, %v346
      %v350 = vmul.f32 %v338, %v343
      %v351 = vmul.f32 %v337, %v347
      %352 = vrot.lane.b32.xlu0 %v253, 127
      %v353 = vpop.permute.xlu0 %352
      %354 = vrot.lane.b32.xlu0 %v254, 127
      %v355 = vpop.permute.xlu0 %354
      %vm356 = vcmp.lt.s32.totalorder %v275, 127
      %v357 = vsel %vm356, %v353, %v355
      %v358 = vsel %vm356, %v355, %v353
      %v360 = vlaneseq
      %v361 = vshrl.u32 %v360, 7
      %v362 = vsub.s32 0, %v361
      %v363 = vrot.slane %v263, %v362
      %v364 = vlaneseq
      %v365 = vshrl.u32 %v364, 7
      %v366 = vsub.s32 1, %v365
      %v367 = vrot.slane %v263, %v366
      %v370 = vmul.f32 %v357, %v363
      %v371 = vmul.f32 %v358, %v367
      %372 = vrot.lane.b32.xlu0 %v253, 113
      %v373 = vpop.permute.xlu0 %372
      %374 = vrot.lane.b32.xlu0 %v254, 113
      %v375 = vpop.permute.xlu0 %374
      %vm376 = vcmp.lt.s32.totalorder %v275, 113
      %v377 = vsel %vm376, %v373, %v375
      %v378 = vsel %vm376, %v375, %v373
      %v380 = vlaneseq
      %v381 = vshrl.u32 %v380, 7
      %v382 = vsub.s32 0, %v381
      %v383 = vrot.slane %v265, %v382
      %v384 = vlaneseq
      %v385 = vshrl.u32 %v384, 7
      %v386 = vsub.s32 1, %v385
      %v387 = vrot.slane %v265, %v386
      %v390 = vmul.f32 %v377, %v383
      %v391 = vmul.f32 %v378, %v387
      %392 = vrot.lane.b32.xlu0 %v253, 112
      %v393 = vpop.permute.xlu0 %392
      %394 = vrot.lane.b32.xlu0 %v254, 112
      %v395 = vpop.permute.xlu0 %394
      %vm396 = vcmp.lt.s32.totalorder %v275, 112
      %v397 = vsel %vm396, %v393, %v395
      %v398 = vsel %vm396, %v395, %v393
      %v400 = vlaneseq
      %v401 = vshrl.u32 %v400, 7
      %v402 = vsub.s32 0, %v401
      %v403 = vrot.slane %v267, %v402
      %v404 = vlaneseq
      %v405 = vshrl.u32 %v404, 7
      %v406 = vsub.s32 1, %v405
      %v407 = vrot.slane %v267, %v406
      %v410 = vmul.f32 %v397, %v403
      %v411 = vmul.f32 %v398, %v407
      %412 = vrot.lane.b32.xlu0 %v253, 111
      %v413 = vpop.permute.xlu0 %412
      %414 = vrot.lane.b32.xlu0 %v254, 111
      %v415 = vpop.permute.xlu0 %414
      %vm416 = vcmp.lt.s32.totalorder %v275, 111
      %v417 = vsel %vm416, %v413, %v415
      %v418 = vsel %vm416, %v415, %v413
      %v420 = vlaneseq
      %v421 = vshrl.u32 %v420, 7
      %v422 = vsub.s32 0, %v421
      %v423 = vrot.slane %v269, %v422
      %v424 = vlaneseq
      %v425 = vshrl.u32 %v424, 7
      %v426 = vsub.s32 1, %v425
      %v427 = vrot.slane %v269, %v426
      %v430 = vmul.f32 %v417, %v423
      %v431 = vmul.f32 %v418, %v427
      %v432 = vpack.c.bf16 %v310, %v290
      %v433 = vpack.c.bf16 %v311, %v291
      %v434 = vpack.c.bf16 %v350, %v330
      %v435 = vpack.c.bf16 %v351, %v331
      %v436 = vpack.c.bf16 %v370, %v253
      %v437 = vpack.c.bf16 %v371, %v254
      %v438 = vpack.c.bf16 %v410, %v390
      %v439 = vpack.c.bf16 %v411, %v391
      %v440 = vpack.c.bf16 %v430, %v430
      %v441 = vpack.c.bf16 %v431, %v431
      %v442 = vld [vmem:[%s2] sm:$0xf]
      %v443 = vld [vmem:[%s3] sm:$0xff]
      %445 = vset.pattern.permute.xlu0 0
      %446 = vperm.xlu0 %445, %v443
      %v447 = vpop.permute.xlu0 %446
      %vm449 = vcmask 588800
      %v451 = vsel %vm449, %v442, 0
      %vm453 = vcmask 1043456
      %v455 = vsel %vm453, %v440, 0
      %v458 = vsel %vm453, %v441, 0
      %460 = vmatprep.subr.bf16.mxu0 %v433
      %461 = vmatpush1.bf16.msra.mxu0 %v432
      %462 = vmatprep.subr.bf16.mxu0 %v435
      %463 = vmatpush1.bf16.msra.mxu0 %v434
      %464 = vmatprep.subr.bf16.mxu0 %v437
      %465 = vmatpush1.bf16.msra.mxu0 %v436
      %466 = vmatprep.subr.bf16.mxu0 %v439
      %467 = vmatpush1.bf16.msra.mxu0 %v438
      %468 = vmatprep.subr.bf16.mxu0 %v458
      %469 = vmatpush1.bf16.msra.mxu0 %v455
      %470 = vmatprep.subr.bf16.mxu0 0
      %471 = vmatpush1.bf16.msra.mxu0 0
      %472 = vmatprep.subr.bf16.mxu0 0
      %473 = vmatpush1.bf16.msra.mxu0 0
      %474 = vmatprep.subr.bf16.mxu0 0
      %475 = vmatpush1.bf16.msra.mxu0 0
      %476 = vmatprep.subr.bf16.mxu0 0
      %477 = vmatpush1.bf16.msra.mxu0 0
      %478 = vmatprep.subr.bf16.mxu0 0
      %479 = vmatpush1.bf16.msra.mxu0 0
      %480 = vmatprep.subr.bf16.mxu0 0
      %481 = vmatpush1.bf16.msra.mxu0 0
      %482 = vmatprep.subr.bf16.mxu0 0
      %483 = vmatpush1.bf16.msra.mxu0 0
      %484 = vmatprep.subr.bf16.mxu0 0
      %485 = vmatpush1.bf16.msra.mxu0 0
      %486 = vmatprep.subr.bf16.mxu0 0
      %487 = vmatpush1.bf16.msra.mxu0 0
      %488 = vmatprep.subr.bf16.mxu0 0
      %489 = vmatpush1.bf16.msra.mxu0 0
      %490 = vmatprep.subr.bf16.mxu0 0
      %491 = vmatpush1.bf16.msra.mxu0 0
      %492 = vmatprep.mubr.bf16.mxu0 0
      %493 = vmatmul.mubr.bf16.gmra.mrb[0].mxu0 %v451
      %v494 = vpop.f32.mrb[0].mxu0
      %v495 = vadd.f32 %v447, %v494
      %v496 = vpop.f32.mrb[0].mxu0
      %v497 = vadd.f32 %v447, %v496
      %v498 = vpop.f32.mrb[0].mxu0
      %v499 = vpop.f32.mrb[0].mxu0
      %500 = vdwg.mxu0
      %v501 = vmax.f32 %v495, 0.0
      %v502 = vmax.f32 %v497, 0.0
      %503 = vrot.lane.b32.xlu0 %v501, 17
      %v504 = vpop.permute.xlu0 %503
      %505 = vrot.lane.b32.xlu0 %v502, 17
      %v506 = vpop.permute.xlu0 %505
      %v507 = vsel %vm276, %v504, %v506
      %v508 = vsel %vm276, %v506, %v504
      %v509 = vmul.f32 %v508, %v283
      %v510 = vmul.f32 %v507, %v287
      %511 = vrot.lane.b32.xlu0 %v501, 16
      %v512 = vpop.permute.xlu0 %511
      %513 = vrot.lane.b32.xlu0 %v502, 16
      %v514 = vpop.permute.xlu0 %513
      %v515 = vsel %vm296, %v512, %v514
      %v516 = vsel %vm296, %v514, %v512
      %v517 = vmul.f32 %v516, %v303
      %v518 = vmul.f32 %v515, %v307
      %519 = vrot.lane.b32.xlu0 %v501, 15
      %v520 = vpop.permute.xlu0 %519
      %521 = vrot.lane.b32.xlu0 %v502, 15
      %v522 = vpop.permute.xlu0 %521
      %v523 = vsel %vm316, %v520, %v522
      %v524 = vsel %vm316, %v522, %v520
      %v525 = vmul.f32 %v524, %v323
      %v526 = vmul.f32 %v523, %v327
      %527 = vrot.lane.b32.xlu0 %v501, 1
      %v528 = vpop.permute.xlu0 %527
      %529 = vrot.lane.b32.xlu0 %v502, 1
      %v530 = vpop.permute.xlu0 %529
      %v531 = vsel %vm336, %v528, %v530
      %v532 = vsel %vm336, %v530, %v528
      %v533 = vmul.f32 %v532, %v343
      %v534 = vmul.f32 %v531, %v347
      %535 = vrot.lane.b32.xlu0 %v501, 127
      %v536 = vpop.permute.xlu0 %535
      %537 = vrot.lane.b32.xlu0 %v502, 127
      %v538 = vpop.permute.xlu0 %537
      %v539 = vsel %vm356, %v536, %v538
      %v540 = vsel %vm356, %v538, %v536
      %v541 = vmul.f32 %v539, %v363
      %v542 = vmul.f32 %v540, %v367
      %543 = vrot.lane.b32.xlu0 %v501, 113
      %v544 = vpop.permute.xlu0 %543
      %545 = vrot.lane.b32.xlu0 %v502, 113
      %v546 = vpop.permute.xlu0 %545
      %v547 = vsel %vm376, %v544, %v546
      %v548 = vsel %vm376, %v546, %v544
      %v549 = vmul.f32 %v547, %v383
      %v550 = vmul.f32 %v548, %v387
      %551 = vrot.lane.b32.xlu0 %v501, 112
      %v552 = vpop.permute.xlu0 %551
      %553 = vrot.lane.b32.xlu0 %v502, 112
      %v554 = vpop.permute.xlu0 %553
      %v555 = vsel %vm396, %v552, %v554
      %v556 = vsel %vm396, %v554, %v552
      %v557 = vmul.f32 %v555, %v403
      %v558 = vmul.f32 %v556, %v407
      %559 = vrot.lane.b32.xlu0 %v501, 111
      %v560 = vpop.permute.xlu0 %559
      %561 = vrot.lane.b32.xlu0 %v502, 111
      %v562 = vpop.permute.xlu0 %561
      %v563 = vsel %vm416, %v560, %v562
      %v564 = vsel %vm416, %v562, %v560
      %v565 = vmul.f32 %v563, %v423
      %v566 = vmul.f32 %v564, %v427
      %v567 = vpack.c.bf16 %v517, %v509
      %v568 = vpack.c.bf16 %v518, %v510
      %v569 = vpack.c.bf16 %v533, %v525
      %v570 = vpack.c.bf16 %v534, %v526
      %v571 = vpack.c.bf16 %v541, %v501
      %v572 = vpack.c.bf16 %v542, %v502
      %v573 = vpack.c.bf16 %v557, %v549
      %v574 = vpack.c.bf16 %v558, %v550
      %v575 = vpack.c.bf16 %v565, %v565
      %v576 = vpack.c.bf16 %v566, %v566
      %v577 = vld [vmem:[%s4] sm:$0xf]
      %v578 = vld [vmem:[%s5] sm:$0xff]
      %580 = vset.pattern.permute.xlu0 0
      %581 = vperm.xlu0 %580, %v578
      %v582 = vpop.permute.xlu0 %581
      %v585 = vsel %vm449, %v577, 0
      %v588 = vsel %vm453, %v575, 0
      %v591 = vsel %vm453, %v576, 0
      %593 = vmatprep.subr.bf16.mxu0 %v568
      %594 = vmatpush1.bf16.msra.mxu0 %v567
      %595 = vmatprep.subr.bf16.mxu0 %v570
      %596 = vmatpush1.bf16.msra.mxu0 %v569
      %597 = vmatprep.subr.bf16.mxu0 %v572
      %598 = vmatpush1.bf16.msra.mxu0 %v571
      %599 = vmatprep.subr.bf16.mxu0 %v574
      %600 = vmatpush1.bf16.msra.mxu0 %v573
      %601 = vmatprep.subr.bf16.mxu0 %v591
      %602 = vmatpush1.bf16.msra.mxu0 %v588
      %603 = vmatprep.subr.bf16.mxu0 0
      %604 = vmatpush1.bf16.msra.mxu0 0
      %605 = vmatprep.subr.bf16.mxu0 0
      %606 = vmatpush1.bf16.msra.mxu0 0
      %607 = vmatprep.subr.bf16.mxu0 0
      %608 = vmatpush1.bf16.msra.mxu0 0
      %609 = vmatprep.subr.bf16.mxu0 0
      %610 = vmatpush1.bf16.msra.mxu0 0
      %611 = vmatprep.subr.bf16.mxu0 0
      %612 = vmatpush1.bf16.msra.mxu0 0
      %613 = vmatprep.subr.bf16.mxu0 0
      %614 = vmatpush1.bf16.msra.mxu0 0
      %615 = vmatprep.subr.bf16.mxu0 0
      %616 = vmatpush1.bf16.msra.mxu0 0
      %617 = vmatprep.subr.bf16.mxu0 0
      %618 = vmatpush1.bf16.msra.mxu0 0
      %619 = vmatprep.subr.bf16.mxu0 0
      %620 = vmatpush1.bf16.msra.mxu0 0
      %621 = vmatprep.subr.bf16.mxu0 0
      %622 = vmatpush1.bf16.msra.mxu0 0
      %623 = vmatprep.subr.bf16.mxu0 0
      %624 = vmatpush1.bf16.msra.mxu0 0
      %625 = vmatprep.mubr.bf16.mxu0 0
      %626 = vmatmul.mubr.bf16.gmra.mrb[0].mxu0 %v585
      %v627 = vpop.f32.mrb[0].mxu0
      %v628 = vadd.f32 %v582, %v627
      %v629 = vpop.f32.mrb[0].mxu0
      %v630 = vadd.f32 %v582, %v629
      %v631 = vpop.f32.mrb[0].mxu0
      %v632 = vpop.f32.mrb[0].mxu0
      %633 = vdwg.mxu0
      %v634 = vmax.f32 %v628, 0.0
      %v635 = vmax.f32 %v630, 0.0
      %636 = vst [vmem:[%s251] sm:$0xff] %v634
      %637 = vst [vmem:[%s251 + $0x8] sm:$0xff] %v635
      %p638 = scmp.lt.s32.totalorder %s17, 1
      %s639 = scalar_select %p638, %s17, 1
      %s640 = smul.addr %s639, 2
      %s641 = smul.addr %s640, 8
      %s642 = scalar_lea.vmem %s6, %s641
      // Predicated region
      $region45: #{block_forward.1} parent=43 // pred_check
        %p643 = pneg %p166
      $region46: #{block_forward.1} parent=43 // pred_check_branch
        %645 = sbr.rel (%p643) target = $region48
      $region47: #{block_forward.1} parent=43 // pred_region
        _
      $region48: #{block_forward.1} parent=43 // pred_fallthru
        _
    $region44: #{block_forward.1} parent=5 // pred_fallthru
      _
    %p646 = scmp.le.s32.totalorder 2, %s12
    // Predicated region
    $region49: #{block_forward.1} parent=5 // pred_check
      %p647 = pneg %p646
    $region50: #{block_forward.1} parent=5 // pred_check_branch
      %649 = sbr.rel (%p647) target = $region52
    $region51: #{block_forward.1} parent=5 // pred_region
      %s650 = ssub.s32 %s12, 2
      // Predicated region
      $region53: #{block_forward.1} parent=51 // pred_check
        %p651 = pneg %p172
      $region54: #{block_forward.1} parent=51 // pred_check_branch
        %653 = sbr.rel (%p651) target = $region56
      $region55: #{block_forward.1} parent=51 // pred_region
        %p654 = scmp.lt.s32.totalorder %s18, 1
        %s655 = scalar_select %p654, %s18, 1
        %s656 = smul.addr %s655, 2
        %s657 = smul.addr %s656, 8
        %s658 = scalar_lea.vmem %s6, %s657
      $region56: #{block_forward.1} parent=51 // pred_fallthru
        _
    $region52: #{block_forward.1} parent=5 // pred_fallthru
      _
  $region6: #{block_forward.1} parent=0 // loop_footer
    %s16 = sadd.s32 1, %s12
  $region7: #{block_forward.1} parent=0 // loop_footer_branch
    %11 = sbr.rel target = $region3
  $region8: #{block_forward.1} parent=0 // loop_exit
    _

</llo_original>
